<compile_context>
chip_gen: v7x
topology: tpu7x:2x2x1
jax: 0.10.0
libtpu: 0.0.40
codegen_flags: <defaults>
</compile_context>

<pallas_src>
import math

import jax
import jax.numpy as jnp
from jax.experimental import pallas as pl
from jax.experimental.pallas import tpu as pltpu


def _row_chunks(n, itemsize, max_chunks=8):
    """Split [0, n) rows into up to `max_chunks` contiguous ranges whose starts
    land on sublane-tile boundaries (dtype-aware: 8/16/32 rows for 4/2/1-byte
    elements), so each HBM->HBM DMA covers whole tiles of the row-major slab."""
    align = 8 * max(1, 4 // max(1, itemsize))  # 8 (f32/i32), 16 (bf16), 32 (i8/fp8)
    if n <= align:
        return [(0, n)]
    n_tiles = -(-n // align)
    k = max(1, min(max_chunks, n_tiles))
    base, rem = divmod(n_tiles, k)
    chunks, row = [], 0
    for i in range(k):
        t = base + (1 if i < rem else 0)
        rows = min(t * align, n - row)
        if rows > 0:
            chunks.append((row, rows))
        row += rows
    return chunks


def _make_flatten_dma_kernel(n_rows, chunks):
    """Kernel factory: both refs live in HBM; issue all chunk DMAs, then wait."""

    def kernel(x_ref, o_ref, sems):
        copies = []
        for idx, (start, rows) in enumerate(chunks):
            if start == 0 and rows == n_rows:
                src, dst = x_ref, o_ref            # whole-array single DMA
            else:
                src = x_ref.at[pl.ds(start, rows)]  # static, tile-aligned slice
                dst = o_ref.at[pl.ds(start, rows)]
            cp = pltpu.make_async_copy(src, dst, sems.at[idx])
            cp.start()
            copies.append(cp)
        for cp in copies:  # all chunks in flight simultaneously
            cp.wait()

    return kernel


def flatten(x):
    """Pallas equivalent of Flatten.forward: returns x reshaped to (N, -1)."""
    n = x.shape[0]
    d = int(math.prod(x.shape[1:])) if x.ndim > 1 else 1
    itemsize = jnp.dtype(x.dtype).itemsize

    # Row-major (N, D) view of the input -- the XLA counterpart of torch's
    # `.view`, free for contiguous data; gives the kernel identically-shaped
    # source/destination slabs so every DMA is a straight contiguous copy.
    x_flat = jnp.reshape(x, (n, d))

    chunks = _row_chunks(n, itemsize)

    return pl.pallas_call(
        _make_flatten_dma_kernel(n, chunks),
        out_shape=jax.ShapeDtypeStruct((n, d), x.dtype),
        in_specs=[pl.BlockSpec(memory_space=pl.ANY)],   # raw HBM ref, no auto-DMA
        out_specs=pl.BlockSpec(memory_space=pl.ANY),    # raw HBM ref, no auto-DMA
        scratch_shapes=[pltpu.SemaphoreType.DMA((len(chunks),))],
        cost_estimate=pl.CostEstimate(
            flops=0, transcendentals=0, bytes_accessed=2 * n * d * itemsize
        ),
    )(x_flat)


if __name__ == "__main__":
    key = jax.random.PRNGKey(0)
    N, C, H, W = 2, 4, 16, 16
    x = jax.random.normal(key, (N, C, H, W), dtype=jnp.float32)

    out = flatten(x)
    out = jax.block_until_ready(out)

    ref = jnp.reshape(x, (N, -1))  # == torch's x.view(N, -1)
    assert out.shape == (N, C * H * W), out.shape
    assert jnp.array_equal(out, ref), "mismatch vs reference flatten"

    print("KERNEL_OK")
</pallas_src>

<mosaic_0001>
module attributes {stable_mosaic.version = 11 : i64} {
  func.func @kernel(%arg0: memref<2x1024xf32, #tpu.memory_space<any>>, %arg1: memref<2x1024xf32, #tpu.memory_space<any>>, %arg2: memref<1x!tpu.dma_semaphore, #tpu.memory_space<semaphore_mem>>) attributes {dimension_semantics = [], scalar_prefetch = 0 : i64, scratch_operands = 1 : i64, tpu.core_type = #tpu.core_type<tc>} {
    %c0_i32 = arith.constant 0 : i32
    %0 = tpu.memref_slice %arg2[%c0_i32] : memref<1x!tpu.dma_semaphore, #tpu.memory_space<semaphore_mem>> -> memref<1x!tpu.dma_semaphore, #tpu.memory_space<semaphore_mem>>
    %1 = tpu.memref_squeeze %0 : memref<1x!tpu.dma_semaphore, #tpu.memory_space<semaphore_mem>> -> memref<!tpu.dma_semaphore, #tpu.memory_space<semaphore_mem>>
    tpu.enqueue_dma source(%arg0 : memref<2x1024xf32, #tpu.memory_space<any>>) target(%arg1 : memref<2x1024xf32, #tpu.memory_space<any>>) target_semaphore(%1 : memref<!tpu.dma_semaphore, #tpu.memory_space<semaphore_mem>>)
    %c0_i32_0 = arith.constant 0 : i32
    %2 = tpu.memref_slice %arg2[%c0_i32_0] : memref<1x!tpu.dma_semaphore, #tpu.memory_space<semaphore_mem>> -> memref<1x!tpu.dma_semaphore, #tpu.memory_space<semaphore_mem>>
    %3 = tpu.memref_squeeze %2 : memref<1x!tpu.dma_semaphore, #tpu.memory_space<semaphore_mem>> -> memref<!tpu.dma_semaphore, #tpu.memory_space<semaphore_mem>>
    tpu.wait_dma2 semaphore(%3 : memref<!tpu.dma_semaphore, #tpu.memory_space<semaphore_mem>>) src(%arg0 : memref<2x1024xf32, #tpu.memory_space<any>>) dst(%arg1 : memref<2x1024xf32, #tpu.memory_space<any>>)
    return
  }
}

</mosaic_0001>

<llo_original>
// kernel: tpu_custom_call.1
$region0: #{tpu_custom_call.1}
  #allocation0 [shape = 'u32[]', space=smem, size = 0x4, offset = 0x4, fixed_abs, tag = 'smem constant byte address 0x4 - core index']
  #allocation1 [shape = 'u32[144,128]{1,0:T(1,128)}', space=vmem, size = 0x12000, scoped, tag = 'internal scratch']
  #allocation2 [shape = 's32[1]{0}', space=sflag, size = 0x4, scoped, tag = 'scratch operand']
  #allocation3 [shape = 's32[]', space=sflag, size = 0x4, offset = 0, fixed_abs, tag = 'sflag constant byte address 0x0 - dummy sync flag']
  #allocation4 [shape = 'u32[0]{0}', space=smem, size = 0, offset = 0, fixed_abs, tag = 'smem constant byte address 0x0 - null']
  %s0 = inlined_call_operand.hbm [shape: f32[2,1024], index: 0, kind: input, shape index: {}]
  %s1 = inlined_call_operand.hbm [shape: f32[2,1024], index: 1, kind: output, shape index: {}]
  %s2 = sld [smem:[#allocation0]]
  $region2: #{tpu_custom_call.1} parent=0
    _
  %s4 = ssub.s32 1, %s2
  %s5 = scalar_select 0, %s4, %s2
  %s7 = sshll.u32 1, 14
  %s8 = sxor.u32 4294967295, %s7
  %s11 = sshll.u32 3, 24
  %s12 = sxor.u32 4294967295, %s11
  %s13 = sand.u32 0, %s12
  %s15 = sor.u32 %s13, 0
  %18 = dma.general %s0, 256, %s1, [#allocation2], [#allocation3], [#allocation4], %s15, 0
  %s19 = smul.u32 2, 1
  %s20 = smul.u32 %s19, 8
  %s21 = sshll.u32 %s20, 4
  %22 = dma.done [#allocation2], %s21
  %23 = vsyncmov [#allocation2]
  %s24 = vpop.sfrf %23
  %p25 = scmp.eq.s32.totalorder %s24, 0
  %p26 = pneg %p25
  %28 = shalt.err (%p26)

</llo_original>
